<compile_context>
chip_gen: v5e
topology: v5e:2x2
jax: 0.10.0
libtpu: 0.0.40
codegen_flags: <defaults>
</compile_context>

<pallas_src>
import functools

import jax
import jax.numpy as jnp
from jax.experimental import pallas as pl
from jax.experimental.pallas import tpu as pltpu


# ----------------------------- Pallas kernel --------------------------------
def _dense_tanh_kernel(x_ref, w_ref, b_ref, o_ref, acc_ref):
    """One (tm, tn) output tile; K is reduced over grid axis 2."""
    k = pl.program_id(2)

    @pl.when(k == 0)
    def _():
        acc_ref[...] = jnp.zeros_like(acc_ref)

    # bf16 MXU matmul with f32 accumulation (pure accumulate on inner K steps).
    acc_ref[...] += jnp.dot(
        x_ref[...], w_ref[...], preferred_element_type=jnp.float32
    )

    @pl.when(k == pl.num_programs(2) - 1)
    def _():
        # Epilogue only on the last K step: bias + tanh in f32, cast on store.
        o_ref[...] = jnp.tanh(acc_ref[...] + b_ref[...]).astype(o_ref.dtype)


def _pad_axis(a, mult, axis):
    pad = (-a.shape[axis]) % mult
    if pad == 0:
        return a
    widths = [(0, 0)] * a.ndim
    widths[axis] = (0, pad)
    return jnp.pad(a, widths)


@functools.partial(jax.jit, static_argnames=("tm", "tn", "tk"))
def dense_tanh(x, w, b, *, tm=128, tn=128, tk=256):
    """y = tanh(x @ w + b) via a tiled Pallas TPU kernel.

    x: [M, K], w: [K, N], b: [N].  Arbitrary shapes are zero-padded up to the
    tile grid (zero K-padding contributes nothing to the matmul; padded M/N
    rows/cols are sliced off before returning).
    """
    M, K = x.shape
    K2, N = w.shape
    assert K == K2 and b.shape == (N,)

    # bf16 MXU operands (2x issue rate, half the DMA bytes); f32 bias for the
    # f32 epilogue math.
    x_p = _pad_axis(_pad_axis(x.astype(jnp.bfloat16), tm, 0), tk, 1)
    w_p = _pad_axis(_pad_axis(w.astype(jnp.bfloat16), tk, 0), tn, 1)
    b_p = _pad_axis(b.astype(jnp.float32).reshape(1, N), tn, 1)

    Mp, Kp = x_p.shape
    Np = w_p.shape[1]
    grid = (Mp // tm, Np // tn, Kp // tk)

    out = pl.pallas_call(
        _dense_tanh_kernel,
        out_shape=jax.ShapeDtypeStruct((Mp, Np), jnp.float32),
        grid=grid,
        in_specs=[
            pl.BlockSpec((tm, tk), lambda i, j, k: (i, k)),
            pl.BlockSpec((tk, tn), lambda i, j, k: (k, j)),
            pl.BlockSpec((1, tn), lambda i, j, k: (0, j)),
        ],
        out_specs=pl.BlockSpec((tm, tn), lambda i, j, k: (i, j)),
        scratch_shapes=[pltpu.VMEM((tm, tn), jnp.float32)],
        compiler_params=pltpu.CompilerParams(
            dimension_semantics=("parallel", "parallel", "arbitrary"),
            # Conservative explicit limit: fits v7x's 64 MiB physical VMEM
            # with the double-buffered bf16 tiles + f32 accumulator.
            vmem_limit_bytes=64 * 1024 * 1024,
        ),
    )(x_p, w_p, b_p)

    return out[:M, :N]


# --------------------------- wrapped "model" ---------------------------------
class TinyDenseModel:
    """Synthetic stand-in for the wrapped tacotron model: one dense+tanh layer."""

    def __init__(self, d_in, d_out, dtype=jnp.float32):
        kw, kb = jax.random.split(jax.random.PRNGKey(42))
        self.w = jax.random.normal(kw, (d_in, d_out), dtype) * 0.02
        self.b = jax.random.normal(kb, (d_out,), dtype) * 0.02

    def __call__(self, *, inputs):
        return dense_tanh(inputs, self.w, self.b)


class ModelWrapper:
    """Faithful port of tacotron.train_util.ModelWrapper.

    forward(**kwargs) invokes the wrapped model with the keyword arguments and
    — matching the PyTorch code, which has no return statement — returns None.
    The wrapped model's compute (the Pallas kernel) still runs.
    """

    def __init__(self, model):
        self.model = model
        self._last = None  # handle so the test harness can block on the launch

    def forward(self, **kwargs):
        self._last = self.model(**kwargs)
        return None  # PyTorch forward returns None

    __call__ = forward


# --------------------------------- main --------------------------------------
if __name__ == "__main__":
    # Small but MXU-friendly shapes: full 128-wide output tiles, grid (2, 2, 1).
    B, D_IN, D_OUT = 256, 256, 256

    key = jax.random.PRNGKey(0)
    x = jax.random.normal(key, (B, D_IN), jnp.float32)

    model = TinyDenseModel(D_IN, D_OUT)
    wrapper = ModelWrapper(model)

    # Run the wrapper once: kernel executes, wrapper returns None (as in PyTorch).
    out = wrapper(inputs=x)
    assert out is None, "ModelWrapper.forward must return None"

    # Block on the underlying Pallas kernel result.
    y = jax.block_until_ready(wrapper._last)

    # Reference: same bf16 operands / f32 accumulation as the kernel.
    y_ref = jnp.tanh(
        jnp.dot(
            x.astype(jnp.bfloat16),
            model.w.astype(jnp.bfloat16),
            preferred_element_type=jnp.float32,
        )
        + model.b.astype(jnp.float32)
    )

    assert y.shape == (B, D_OUT)
    assert jnp.allclose(y, y_ref, atol=2e-3, rtol=2e-3), float(
        jnp.max(jnp.abs(y - y_ref))
    )

    print("KERNEL_OK")
</pallas_src>

<mosaic_0001>
module attributes {stable_mosaic.version = 11 : i64} {
  func.func @_dense_tanh_kernel(%arg0: i32, %arg1: i32, %arg2: i32, %arg3: memref<128x256xbf16, #tpu.memory_space<vmem>>, %arg4: memref<256x128xbf16, #tpu.memory_space<vmem>>, %arg5: memref<1x128xf32, #tpu.memory_space<vmem>>, %arg6: memref<128x128xf32, #tpu.memory_space<vmem>>, %arg7: memref<128x128xf32, #tpu.memory_space<vmem>>) attributes {dimension_semantics = [#tpu.dimension_semantics<parallel>, #tpu.dimension_semantics<parallel>, #tpu.dimension_semantics<arbitrary>], iteration_bounds = array<i64: 2, 2, 1>, scalar_prefetch = 0 : i64, scratch_operands = 1 : i64, tpu.core_type = #tpu.core_type<tc>, window_params = [{transform_indices = @transform_0, window_bounds = array<i64: 128, 256>}, {transform_indices = @transform_1, window_bounds = array<i64: 256, 128>}, {transform_indices = @transform_2, window_bounds = array<i64: 1, 128>}, {transform_indices = @transform_3, window_bounds = array<i64: 128, 128>}]} {
    %c0_i32 = arith.constant 0 : i32
    %0 = arith.cmpi eq, %arg2, %c0_i32 : i32
    %1 = arith.extui %0 : i1 to i32
    %c0_i32_0 = arith.constant 0 : i32
    %2 = arith.cmpi ne, %1, %c0_i32_0 : i32
    scf.if %2 {
      %cst_10 = arith.constant 0.000000e+00 : f32
      %12 = vector.broadcast %cst_10 : f32 to vector<128x128xf32>
      %c0_11 = arith.constant 0 : index
      %c0_12 = arith.constant 0 : index
      %13 = vector.load %arg7[%c0_11, %c0_12] : memref<128x128xf32, #tpu.memory_space<vmem>>, vector<128x128xf32>
      tpu.vector_store %arg7[%c0_11, %c0_12], %12 {strides = array<i32>} : memref<128x128xf32, #tpu.memory_space<vmem>>, vector<128x128xf32>,
    } else {
    }
    %c0 = arith.constant 0 : index
    %c0_1 = arith.constant 0 : index
    %3 = vector.load %arg7[%c0, %c0_1] : memref<128x128xf32, #tpu.memory_space<vmem>>, vector<128x128xf32>
    %c0_2 = arith.constant 0 : index
    %c0_3 = arith.constant 0 : index
    %4 = vector.load %arg3[%c0_2, %c0_3] : memref<128x256xbf16, #tpu.memory_space<vmem>>, vector<128x256xbf16>
    %c0_4 = arith.constant 0 : index
    %c0_5 = arith.constant 0 : index
    %5 = vector.load %arg4[%c0_4, %c0_5] : memref<256x128xbf16, #tpu.memory_space<vmem>>, vector<256x128xbf16>
    %cst = arith.constant dense<0.000000e+00> : vector<128x128xf32>
    %6 = tpu.matmul %4, %5, %cst {dimension_numbers = #tpu.dot_dimension_numbers<[1], [0], [0], [1], [0, 0, 1, 1], [], []>} : vector<128x256xbf16>, vector<256x128xbf16>, vector<128x128xf32> -> vector<128x128xf32>
    %7 = arith.addf %3, %6 : vector<128x128xf32>
    %c0_6 = arith.constant 0 : index
    %c0_7 = arith.constant 0 : index
    %8 = vector.load %arg7[%c0_6, %c0_7] : memref<128x128xf32, #tpu.memory_space<vmem>>, vector<128x128xf32>
    tpu.vector_store %arg7[%c0_6, %c0_7], %7 {strides = array<i32>} : memref<128x128xf32, #tpu.memory_space<vmem>>, vector<128x128xf32>,
    %c0_i32_8 = arith.constant 0 : i32
    %9 = arith.cmpi eq, %arg2, %c0_i32_8 : i32
    %10 = arith.extui %9 : i1 to i32
    %c0_i32_9 = arith.constant 0 : i32
    %11 = arith.cmpi ne, %10, %c0_i32_9 : i32
    scf.if %11 {
      %c0_10 = arith.constant 0 : index
      %c0_11 = arith.constant 0 : index
      %12 = vector.load %arg7[%c0_10, %c0_11] : memref<128x128xf32, #tpu.memory_space<vmem>>, vector<128x128xf32>
      %c0_12 = arith.constant 0 : index
      %c0_13 = arith.constant 0 : index
      %13 = vector.load %arg5[%c0_12, %c0_13] : memref<1x128xf32, #tpu.memory_space<vmem>>, vector<1x128xf32>
      %14 = vector.broadcast %13 : vector<1x128xf32> to vector<128x128xf32>
      %15 = arith.addf %12, %14 : vector<128x128xf32>
      %16 = math.tanh %15 : vector<128x128xf32>
      %c0_14 = arith.constant 0 : index
      %c0_15 = arith.constant 0 : index
      %17 = vector.load %arg6[%c0_14, %c0_15] : memref<128x128xf32, #tpu.memory_space<vmem>>, vector<128x128xf32>
      tpu.vector_store %arg6[%c0_14, %c0_15], %16 {strides = array<i32>} : memref<128x128xf32, #tpu.memory_space<vmem>>, vector<128x128xf32>,
    } else {
    }
    return
  }
  func.func @transform_0(%arg0: i32, %arg1: i32, %arg2: i32) -> (i32, i32) {
    %c0_i32 = arith.constant 0 : i32
    return %arg0, %arg2 : i32, i32
  }
  func.func @transform_1(%arg0: i32, %arg1: i32, %arg2: i32) -> (i32, i32) {
    %c0_i32 = arith.constant 0 : i32
    return %arg2, %arg1 : i32, i32
  }
  func.func @transform_2(%arg0: i32, %arg1: i32, %arg2: i32) -> (i32, i32) {
    %c0_i32 = arith.constant 0 : i32
    %c0_i32_0 = arith.constant 0 : i32
    return %c0_i32, %arg1 : i32, i32
  }
  func.func @transform_3(%arg0: i32, %arg1: i32, %arg2: i32) -> (i32, i32) {
    %c0_i32 = arith.constant 0 : i32
    return %arg0, %arg1 : i32, i32
  }
}

</mosaic_0001>

<llo_original>
// kernel: dense_tanh.1
$region0: #{dense_tanh.1}
  #allocation0 [shape = 'u32[]', space=smem, size = 0x4, offset = 0x4, fixed_abs, tag = 'smem constant byte address 0x4 - core index']
  #allocation1 [shape = 'u32[72,128]{1,0:T(1,128)}', space=vmem, size = 0x9000, scoped, tag = 'internal scratch']
  #allocation2 [shape = 'f32[128,128]{1,0:T(8,128)}', space=vmem, size = 0x10000, scoped, tag = 'scratch operand']
  %s0 = inlined_call_operand.vmem [shape: bf16[256,256], index: 0, kind: input, shape index: {}]
  %s1 = inlined_call_operand.vmem [shape: bf16[256,256], index: 1, kind: input, shape index: {}]
  %s2 = inlined_call_operand.vmem [shape: f32[1,256], index: 2, kind: input, shape index: {}]
  %s3 = inlined_call_operand.hbm [shape: f32[256,256], index: 3, kind: output, shape index: {}]
  %s4 = sld [smem:[#allocation0]]
  $region94: #{dense_tanh.1} parent=0
    _
  %s6 = ssub.s32 1, %s4
  %s7 = scalar_select 0, %s6, %s4
  $region1: #{dense_tanh.1} parent=0
    #allocation3 [shape = 'u8[131072]{0}', space=vmem, size = 0x20000, scoped, tag = 'input window, operand 1']
    #allocation4 [shape = 'u8[131072]{0}', space=vmem, size = 0x20000, scoped, tag = 'output window, operand 0']
    #allocation5 [shape = 's32[2]{0}', space=sflag, size = 0x8, scoped, tag = 'scoped memory for dense_tanh.1']
    %8 = vsyncpa [#allocation5], 0
    %s9 = scalar_lea.sflag [#allocation5], 1
    %10 = vsyncpa %s9, 0
    loop: start=0, step=1, limit=6
    $region2: #{dense_tanh.1} parent=1 // loop_pre_header
      _
    $region3: #{dense_tanh.1} parent=1 // loop_header
      %s12 = sphi 0, %s16
      %p13 = scmp.ge.s32.totalorder %s12, 6
      %s19 = sphi 0, %s38
      %s20 = sphi 0, %s34
      %s21 = sphi 0, %s30
      %s22 = sphi 0, %s19
      %s23 = sphi 0, %s20
      %s24 = sphi 0, %s21
      %s25 = sphi 0, %s22
      %s26 = sphi 0, %s23
      %s27 = sphi 0, %s24
      %s43 = sphi 0, %s45
      %s46 = sphi 0, %s43
      %s47 = sphi 0, %s46
      %s63 = sphi 0, %s47
      %s71 = sphi 0, %s73
      %s74 = sphi 0, %s71
      %s75 = sphi 0, %s74
      %s91 = sphi 0, %s75
      %s97 = sphi 0, %s99
      %s100 = sphi 0, %s97
      %s101 = sphi 0, %s100
      %s117 = sphi 0, %s101
      %s125 = sphi 0, %s127
      %s128 = sphi 0, %s125
      %s129 = sphi 0, %s128
      %s145 = sphi 0, %s129
    $region4: #{dense_tanh.1} parent=1 // loop_header_branch
      %15 = sbr.rel (%p13) target = $region8
    $region5: #{dense_tanh.1} parent=1 // loop_body
      %s17 = ssub.s32 %s12, 1
      %s18 = ssub.s32 %s12, 2
      %s28 = sadd.s32 1, %s21
      %p29 = scmp.ge.s32.totalorder %s28, 1
      %s30 = scalar_select %p29, 0, %s28
      %s31 = sadd.s32 1, %s20
      %s32 = scalar_select %p29, %s31, %s20
      %p33 = scmp.ge.s32.totalorder %s32, 2
      %s34 = scalar_select %p33, 0, %s32
      %s35 = sadd.s32 1, %s19
      %s36 = scalar_select %p33, %s35, %s19
      %p37 = scmp.ge.s32.totalorder %s36, 2
      %s38 = scalar_select %p37, 0, %s36
      %s39 = ssub.s32 %s19, %s38
      %s40 = ssub.s32 %s21, %s30
      %s41 = sor.u32 %s39, %s40
      %p42 = scmp.eq.s32.totalorder %s41, 0
      %s44 = sadd.s32 %s43, 1
      %s45 = scalar_select %p42, %s43, %s44
      %p48 = pneg %p42
      %p49 = scmp.eq.s32.totalorder %s12, 3
      %p50 = por %p48, %p49
      %p51 = scmp.ne.s32.totalorder %s43, %s46
      %p52 = scmp.eq.s32.totalorder %s12, 0
      %p53 = por %p51, %p52
      %p54 = scmp.ne.s32.totalorder %s43, %s46
      %p55 = scmp.eq.s32.totalorder %s17, 3
      %p56 = por %p54, %p55
      %p57 = scmp.ne.s32.totalorder %s46, %s47
      %p58 = scmp.eq.s32.totalorder %s17, 0
      %p59 = por %p57, %p58
      %p60 = scmp.ne.s32.totalorder %s46, %s47
      %p61 = scmp.eq.s32.totalorder %s18, 3
      %p62 = por %p60, %p61
      %p64 = scmp.ne.s32.totalorder %s47, %s63
      %p65 = scmp.eq.s32.totalorder %s18, 0
      %p66 = por %p64, %p65
      %s67 = ssub.s32 %s21, %s30
      %s68 = ssub.s32 %s20, %s34
      %s69 = sor.u32 %s67, %s68
      %p70 = scmp.eq.s32.totalorder %s69, 0
      %s72 = sadd.s32 %s71, 1
      %s73 = scalar_select %p70, %s71, %s72
      %p76 = pneg %p70
      %p77 = scmp.eq.s32.totalorder %s12, 3
      %p78 = por %p76, %p77
      %p79 = scmp.ne.s32.totalorder %s71, %s74
      %p80 = scmp.eq.s32.totalorder %s12, 0
      %p81 = por %p79, %p80
      %p82 = scmp.ne.s32.totalorder %s71, %s74
      %p83 = scmp.eq.s32.totalorder %s17, 3
      %p84 = por %p82, %p83
      %p85 = scmp.ne.s32.totalorder %s74, %s75
      %p86 = scmp.eq.s32.totalorder %s17, 0
      %p87 = por %p85, %p86
      %p88 = scmp.ne.s32.totalorder %s74, %s75
      %p89 = scmp.eq.s32.totalorder %s18, 3
      %p90 = por %p88, %p89
      %p92 = scmp.ne.s32.totalorder %s75, %s91
      %p93 = scmp.eq.s32.totalorder %s18, 0
      %p94 = por %p92, %p93
      %s95 = ssub.s32 %s20, %s34
      %p96 = scmp.eq.s32.totalorder %s95, 0
      %s98 = sadd.s32 %s97, 1
      %s99 = scalar_select %p96, %s97, %s98
      %p102 = pneg %p96
      %p103 = scmp.eq.s32.totalorder %s12, 3
      %p104 = por %p102, %p103
      %p105 = scmp.ne.s32.totalorder %s97, %s100
      %p106 = scmp.eq.s32.totalorder %s12, 0
      %p107 = por %p105, %p106
      %p108 = scmp.ne.s32.totalorder %s97, %s100
      %p109 = scmp.eq.s32.totalorder %s17, 3
      %p110 = por %p108, %p109
      %p111 = scmp.ne.s32.totalorder %s100, %s101
      %p112 = scmp.eq.s32.totalorder %s17, 0
      %p113 = por %p111, %p112
      %p114 = scmp.ne.s32.totalorder %s100, %s101
      %p115 = scmp.eq.s32.totalorder %s18, 3
      %p116 = por %p114, %p115
      %p118 = scmp.ne.s32.totalorder %s101, %s117
      %p119 = scmp.eq.s32.totalorder %s18, 0
      %p120 = por %p118, %p119
      %s121 = ssub.s32 %s19, %s38
      %s122 = ssub.s32 %s20, %s34
      %s123 = sor.u32 %s121, %s122
      %p124 = scmp.eq.s32.totalorder %s123, 0
      %s126 = sadd.s32 %s125, 1
      %s127 = scalar_select %p124, %s125, %s126
      %p130 = pneg %p124
      %p131 = scmp.eq.s32.totalorder %s12, 3
      %p132 = por %p130, %p131
      %p133 = scmp.ne.s32.totalorder %s125, %s128
      %p134 = scmp.eq.s32.totalorder %s12, 0
      %p135 = por %p133, %p134
      %p136 = scmp.ne.s32.totalorder %s125, %s128
      %p137 = scmp.eq.s32.totalorder %s17, 3
      %p138 = por %p136, %p137
      %p139 = scmp.ne.s32.totalorder %s128, %s129
      %p140 = scmp.eq.s32.totalorder %s17, 0
      %p141 = por %p139, %p140
      %p142 = scmp.ne.s32.totalorder %s128, %s129
      %p143 = scmp.eq.s32.totalorder %s18, 3
      %p144 = por %p142, %p143
      %p146 = scmp.ne.s32.totalorder %s129, %s145
      %p147 = scmp.eq.s32.totalorder %s18, 0
      %p148 = por %p146, %p147
      %p149 = scmp.le.s32.totalorder 1, %s12
      %p150 = scmp.lt.s32.totalorder %s12, 5
      %p151 = pnand %p149, %p150
      %p152 = pneg %p151
      // Predicated region
      $region9: #{dense_tanh.1} parent=5 // pred_check
        _
      $region10: #{dense_tanh.1} parent=5 // pred_check_branch
        %154 = sbr.rel (%p151) target = $region12
      $region11: #{dense_tanh.1} parent=5 // pred_region
        %s155 = ssub.s32 %s12, 1
      $region12: #{dense_tanh.1} parent=5 // pred_fallthru
        _
      %p156 = scmp.lt.s32.totalorder %s12, 4
      // Predicated region
      $region13: #{dense_tanh.1} parent=5 // pred_check
        %p157 = pneg %p156
      $region14: #{dense_tanh.1} parent=5 // pred_check_branch
        %159 = sbr.rel (%p157) target = $region16
      $region15: #{dense_tanh.1} parent=5 // pred_region
        // Predicated region
        $region17: #{dense_tanh.1} parent=15 // pred_check
          %p160 = pneg %p53
        $region18: #{dense_tanh.1} parent=15 // pred_check_branch
          %162 = sbr.rel (%p160) target = $region20
        $region19: #{dense_tanh.1} parent=15 // pred_region
          %s163 = smul.u32 16, %s19
          %s164 = smul.u32 2, %s21
          %p165 = scmp.lt.s32.totalorder %s163, 31
          %s166 = scalar_select %p165, %s163, 31
          %p167 = scmp.lt.s32.totalorder %s164, 1
          %s168 = scalar_select %p167, %s164, 1
          %s169 = smul.addr %s166, 2
          %s170 = sadd.s32 %s168, %s169
          %s171 = smul.addr %s170, 4
          %s172 = scalar_lea.vmem %s0, %s171
          %s173 = smul.u32 16, %s19
          %s174 = smul.u32 2, %s21
        $region20: #{dense_tanh.1} parent=15 // pred_fallthru
          _
        // Predicated region
        $region21: #{dense_tanh.1} parent=15 // pred_check
          %p175 = pneg %p81
        $region22: #{dense_tanh.1} parent=15 // pred_check_branch
          %177 = sbr.rel (%p175) target = $region24
        $region23: #{dense_tanh.1} parent=15 // pred_region
          %s178 = sand.u32 %s71, 1
          %s179 = sand.u32 %s71, 1
          %s180 = smul.addr %s179, 128
          %s181 = scalar_lea.vmem [#allocation3], %s180
          %s182 = smul.u32 32, %s21
          %s183 = smul.addr %s182, 2
          %s184 = sadd.s32 %s20, %s183
          %s185 = smul.addr %s184, 4
          %s186 = scalar_lea.vmem %s1, %s185
          // Predicated region
          $region25: #{dense_tanh.1} parent=23 // pred_check
            _
          $region26: #{dense_tanh.1} parent=23 // pred_check_branch
            %188 = sbr.rel (0) target = $region28
          $region27: #{dense_tanh.1} parent=23 // pred_region
            // Predicated region
            $region29: #{dense_tanh.1} parent=27 // pred_check
              _
            $region30: #{dense_tanh.1} parent=27 // pred_check_branch
              %190 = sbr.rel target = $region32
            $region31: #{dense_tanh.1} parent=27 // pred_region
              // Predicated region
              $region44: #{dense_tanh.1} parent=31 // pred_check
                _
              $region45: #{dense_tanh.1} parent=31 // pred_check_branch
                %268 = sbr.rel (0) target = $region47
              $region46: #{dense_tanh.1} parent=31 // pred_region
                loop: start=0, step=1, limit=1
                $region48: #{dense_tanh.1} parent=46 // loop_pre_header
                  _
                $region49: #{dense_tanh.1} parent=46 // loop_header
                  %s270 = sphi 0, %s274
                  %p271 = scmp.ge.s32.totalorder %s270, 1
                  %s275 = sphi %s186, %s186
                  %s276 = sphi %s181, %s181
                $region50: #{dense_tanh.1} parent=46 // loop_header_branch
                  %273 = sbr.rel (%p271) target = $region54
                $region51: #{dense_tanh.1} parent=46 // loop_body
                  _
                $region52: #{dense_tanh.1} parent=46 // loop_footer
                  %s274 = sadd.s32 1, %s270
                $region53: #{dense_tanh.1} parent=46 // loop_footer_branch
                  %269 = sbr.rel target = $region49
                $region54: #{dense_tanh.1} parent=46 // loop_exit
                  _
                %s278 = ssub.s32 16, 1
                loop: start=0, step=1, limit=1
                $region55: #{dense_tanh.1} parent=46 // loop_pre_header
                  _
                $region56: #{dense_tanh.1} parent=46 // loop_header
                  %s280 = sphi 0, %s284
                  %p281 = scmp.ge.s32.totalorder %s280, 1
                  %s285 = sphi %s186, %s186
                  %s286 = sphi %s181, %s181
                $region57: #{dense_tanh.1} parent=46 // loop_header_branch
                  %283 = sbr.rel (%p281) target = $region61
                $region58: #{dense_tanh.1} parent=46 // loop_body
                  %v287 = vld [vmem:[%s285] sm:%s278]
                  %288 = vst [vmem:[%s286] sm:%s278] %v287
                  %v289 = vld [vmem:[%s285 + $0x8] sm:%s278]
                  %290 = vst [vmem:[%s286 + $0x4] sm:%s278] %v289
                  %v291 = vld [vmem:[%s285 + $0x10] sm:%s278]
                  %292 = vst [vmem:[%s286 + $0x8] sm:%s278] %v291
                  %v293 = vld [vmem:[%s285 + $0x18] sm:%s278]
                  %294 = vst [vmem:[%s286 + $0xc] sm:%s278] %v293
                  %v295 = vld [vmem:[%s285 + $0x20] sm:%s278]
                  %296 = vst [vmem:[%s286 + $0x10] sm:%s278] %v295
                  %v297 = vld [vmem:[%s285 + $0x28] sm:%s278]
                  %298 = vst [vmem:[%s286 + $0x14] sm:%s278] %v297
                  %v299 = vld [vmem:[%s285 + $0x30] sm:%s278]
                  %300 = vst [vmem:[%s286 + $0x18] sm:%s278] %v299
                  %v301 = vld [vmem:[%s285 + $0x38] sm:%s278]
                  %302 = vst [vmem:[%s286 + $0x1c] sm:%s278] %v301
                  %v303 = vld [vmem:[%s285 + $0x40] sm:%s278]
                  %304 = vst [vmem:[%s286 + $0x20] sm:%s278] %v303
                  %v305 = vld [vmem:[%s285 + $0x48] sm:%s278]
                  %306 = vst [vmem:[%s286 + $0x24] sm:%s278] %v305
                  %v307 = vld [vmem:[%s285 + $0x50] sm:%s278]
                  %308 = vst [vmem:[%s286 + $0x28] sm:%s278] %v307
                  %v309 = vld [vmem:[%s285 + $0x58] sm:%s278]
                  %310 = vst [vmem:[%s286 + $0x2c] sm:%s278] %v309
                  %v311 = vld [vmem:[%s285 + $0x60] sm:%s278]
                  %312 = vst [vmem:[%s286 + $0x30] sm:%s278] %v311
                  %v313 = vld [vmem:[%s285 + $0x68] sm:%s278]
                  %314 = vst [vmem:[%s286 + $0x34] sm:%s278] %v313
                  %v315 = vld [vmem:[%s285 + $0x70] sm:%s278]
                  %316 = vst [vmem:[%s286 + $0x38] sm:%s278] %v315
                  %v317 = vld [vmem:[%s285 + $0x78] sm:%s278]
                  %318 = vst [vmem:[%s286 + $0x3c] sm:%s278] %v317
                  %v319 = vld [vmem:[%s285 + $0x80] sm:%s278]
                  %320 = vst [vmem:[%s286 + $0x40] sm:%s278] %v319
                  %v321 = vld [vmem:[%s285 + $0x88] sm:%s278]
                  %322 = vst [vmem:[%s286 + $0x44] sm:%s278] %v321
                  %v323 = vld [vmem:[%s285 + $0x90] sm:%s278]
                  %324 = vst [vmem:[%s286 + $0x48] sm:%s278] %v323
                  %v325 = vld [vmem:[%s285 + $0x98] sm:%s278]
                  %326 = vst [vmem:[%s286 + $0x4c] sm:%s278] %v325
                  %v327 = vld [vmem:[%s285 + $0xa0] sm:%s278]
                  %328 = vst [vmem:[%s286 + $0x50] sm:%s278] %v327
                  %v329 = vld [vmem:[%s285 + $0xa8] sm:%s278]
                  %330 = vst [vmem:[%s286 + $0x54] sm:%s278] %v329
                  %v331 = vld [vmem:[%s285 + $0xb0] sm:%s278]
                  %332 = vst [vmem:[%s286 + $0x58] sm:%s278] %v331
                  %v333 = vld [vmem:[%s285 + $0xb8] sm:%s278]
                  %334 = vst [vmem:[%s286 + $0x5c] sm:%s278] %v333
                  %v335 = vld [vmem:[%s285 + $0xc0] sm:%s278]
                  %336 = vst [vmem:[%s286 + $0x60] sm:%s278] %v335
                  %v337 = vld [vmem:[%s285 + $0xc8] sm:%s278]
                  %338 = vst [vmem:[%s286 + $0x64] sm:%s278] %v337
                  %v339 = vld [vmem:[%s285 + $0xd0] sm:%s278]
                  %340 = vst [vmem:[%s286 + $0x68] sm:%s278] %v339
                  %v341 = vld [vmem:[%s285 + $0xd8] sm:%s278]
                  %342 = vst [vmem:[%s286 + $0x6c] sm:%s278] %v341
                  %v343 = vld [vmem:[%s285 + $0xe0] sm:%s278]
                  %344 = vst [vmem:[%s286 + $0x70] sm:%s278] %v343
                  %v345 = vld [vmem:[%s285 + $0xe8] sm:%s278]
                  %346 = vst [vmem:[%s286 + $0x74] sm:%s278] %v345
                  %v347 = vld [vmem:[%s285 + $0xf0] sm:%s278]
                  %348 = vst [vmem:[%s286 + $0x78] sm:%s278] %v347
                  %v349 = vld [vmem:[%s285 + $0xf8] sm:%s278]
                  %350 = vst [vmem:[%s286 + $0x7c] sm:%s278] %v349
                $region59: #{dense_tanh.1} parent=46 // loop_footer
                  %s284 = sadd.s32 1, %s280
                $region60: #{dense_tanh.1} parent=46 // loop_footer_branch
                  %279 = sbr.rel target = $region56
                $region61: #{dense_tanh.1} parent=46 // loop_exit
                  _
              $region47: #{dense_tanh.1} parent=31 // pred_fallthru
                _
            $region32: #{dense_tanh.1} parent=27 // pred_fallthru
              _
            // Predicated region
            $region33: #{dense_tanh.1} parent=27 // pred_check
              _
            $region34: #{dense_tanh.1} parent=27 // pred_check_branch
              %192 = sbr.rel (0) target = $region36
            $region35: #{dense_tanh.1} parent=27 // pred_region
              %s194 = ssub.s32 16, 1
              loop: start=0, step=1, limit=1
              $region37: #{dense_tanh.1} parent=35 // loop_pre_header
                _
              $region38: #{dense_tanh.1} parent=35 // loop_header
                %s196 = sphi 0, %s200
                %p197 = scmp.ge.s32.totalorder %s196, 1
                %s201 = sphi %s186, %s186
                %s202 = sphi %s181, %s181
              $region39: #{dense_tanh.1} parent=35 // loop_header_branch
                %199 = sbr.rel (%p197) target = $region43
              $region40: #{dense_tanh.1} parent=35 // loop_body
                %v203 = vld [vmem:[%s201] sm:%s194]
                %204 = vst [vmem:[%s202] sm:%s194] %v203
                %v205 = vld [vmem:[%s201 + $0x8] sm:%s194]
                %206 = vst [vmem:[%s202 + $0x4] sm:%s194] %v205
                %v207 = vld [vmem:[%s201 + $0x10] sm:%s194]
                %208 = vst [vmem:[%s202 + $0x8] sm:%s194] %v207
                %v209 = vld [vmem:[%s201 + $0x18] sm:%s194]
                %210 = vst [vmem:[%s202 + $0xc] sm:%s194] %v209
                %v211 = vld [vmem:[%s201 + $0x20] sm:%s194]
                %212 = vst [vmem:[%s202 + $0x10] sm:%s194] %v211
                %v213 = vld [vmem:[%s201 + $0x28] sm:%s194]
                %214 = vst [vmem:[%s202 + $0x14] sm:%s194] %v213
                %v215 = vld [vmem:[%s201 + $0x30] sm:%s194]
                %216 = vst [vmem:[%s202 + $0x18] sm:%s194] %v215
                %v217 = vld [vmem:[%s201 + $0x38] sm:%s194]
                %218 = vst [vmem:[%s202 + $0x1c] sm:%s194] %v217
                %v219 = vld [vmem:[%s201 + $0x40] sm:%s194]
                %220 = vst [vmem:[%s202 + $0x20] sm:%s194] %v219
                %v221 = vld [vmem:[%s201 + $0x48] sm:%s194]
                %222 = vst [vmem:[%s202 + $0x24] sm:%s194] %v221
                %v223 = vld [vmem:[%s201 + $0x50] sm:%s194]
                %224 = vst [vmem:[%s202 + $0x28] sm:%s194] %v223
                %v225 = vld [vmem:[%s201 + $0x58] sm:%s194]
                %226 = vst [vmem:[%s202 + $0x2c] sm:%s194] %v225
                %v227 = vld [vmem:[%s201 + $0x60] sm:%s194]
                %228 = vst [vmem:[%s202 + $0x30] sm:%s194] %v227
                %v229 = vld [vmem:[%s201 + $0x68] sm:%s194]
                %230 = vst [vmem:[%s202 + $0x34] sm:%s194] %v229
                %v231 = vld [vmem:[%s201 + $0x70] sm:%s194]
                %232 = vst [vmem:[%s202 + $0x38] sm:%s194] %v231
                %v233 = vld [vmem:[%s201 + $0x78] sm:%s194]
                %234 = vst [vmem:[%s202 + $0x3c] sm:%s194] %v233
                %v235 = vld [vmem:[%s201 + $0x80] sm:%s194]
                %236 = vst [vmem:[%s202 + $0x40] sm:%s194] %v235
                %v237 = vld [vmem:[%s201 + $0x88] sm:%s194]
                %238 = vst [vmem:[%s202 + $0x44] sm:%s194] %v237
                %v239 = vld [vmem:[%s201 + $0x90] sm:%s194]
                %240 = vst [vmem:[%s202 + $0x48] sm:%s194] %v239
                %v241 = vld [vmem:[%s201 + $0x98] sm:%s194]
                %242 = vst [vmem:[%s202 + $0x4c] sm:%s194] %v241
                %v243 = vld [vmem:[%s201 + $0xa0] sm:%s194]
                %244 = vst [vmem:[%s202 + $0x50] sm:%s194] %v243
                %v245 = vld [vmem:[%s201 + $0xa8] sm:%s194]
                %246 = vst [vmem:[%s202 + $0x54] sm:%s194] %v245
                %v247 = vld [vmem:[%s201 + $0xb0] sm:%s194]
                %248 = vst [vmem:[%s202 + $0x58] sm:%s194] %v247
                %v249 = vld [vmem:[%s201 + $0xb8] sm:%s194]
                %250 = vst [vmem:[%s202 + $0x5c] sm:%s194] %v249
                %v251 = vld [vmem:[%s201 + $0xc0] sm:%s194]
                %252 = vst [vmem:[%s202 + $0x60] sm:%s194] %v251
                %v253 = vld [vmem:[%s201 + $0xc8] sm:%s194]
                %254 = vst [vmem:[%s202 + $0x64] sm:%s194] %v253
                %v255 = vld [vmem:[%s201 + $0xd0] sm:%s194]
                %256 = vst [vmem:[%s202 + $0x68] sm:%s194] %v255
                %v257 = vld [vmem:[%s201 + $0xd8] sm:%s194]
                %258 = vst [vmem:[%s202 + $0x6c] sm:%s194] %v257
                %v259 = vld [vmem:[%s201 + $0xe0] sm:%s194]
                %260 = vst [vmem:[%s202 + $0x70] sm:%s194] %v259
                %v261 = vld [vmem:[%s201 + $0xe8] sm:%s194]
                %262 = vst [vmem:[%s202 + $0x74] sm:%s194] %v261
                %v263 = vld [vmem:[%s201 + $0xf0] sm:%s194]
                %264 = vst [vmem:[%s202 + $0x78] sm:%s194] %v263
                %v265 = vld [vmem:[%s201 + $0xf8] sm:%s194]
                %266 = vst [vmem:[%s202 + $0x7c] sm:%s194] %v265
              $region41: #{dense_tanh.1} parent=35 // loop_footer
                %s200 = sadd.s32 1, %s196
              $region42: #{dense_tanh.1} parent=35 // loop_footer_branch
                %195 = sbr.rel target = $region38
              $region43: #{dense_tanh.1} parent=35 // loop_exit
                _
            $region36: #{dense_tanh.1} parent=27 // pred_fallthru
              _
          $region28: #{dense_tanh.1} parent=23 // pred_fallthru
            _
          %351 = vnop
        $region24: #{dense_tanh.1} parent=15 // pred_fallthru
          _
        // Predicated region
        $region62: #{dense_tanh.1} parent=15 // pred_check
          %p352 = pneg %p107
        $region63: #{dense_tanh.1} parent=15 // pred_check_branch
          %354 = sbr.rel (%p352) target = $region65
        $region64: #{dense_tanh.1} parent=15 // pred_region
          %p355 = scmp.lt.s32.totalorder %s20, 1
          %s356 = scalar_select %p355, %s20, 1
          %s357 = scalar_lea.vmem %s2, %s356
        $region65: #{dense_tanh.1} parent=15 // pred_fallthru
          _
      $region16: #{dense_tanh.1} parent=5 // pred_fallthru
        _
      %p358 = scmp.le.s32.totalorder 1, %s12
      %p359 = scmp.lt.s32.totalorder %s12, 5
      %p360 = pnand %p358, %p359
      %p361 = pneg %p360
      // Predicated region
      $region66: #{dense_tanh.1} parent=5 // pred_check
        _
      $region67: #{dense_tanh.1} parent=5 // pred_check_branch
        %363 = sbr.rel (%p360) target = $region69
      $region68: #{dense_tanh.1} parent=5 // pred_region
        %s364 = ssub.s32 %s12, 1
        %s365 = sand.u32 %s74, 1
        %s366 = sand.u32 %s74, 1
        %s367 = smul.addr %s366, 128
        %s368 = scalar_lea.vmem [#allocation3], %s367
        // Predicated region
        $region70: #{dense_tanh.1} parent=68 // pred_check
          %p369 = pneg %p87
        $region71: #{dense_tanh.1} parent=68 // pred_check_branch
          %371 = sbr.rel (%p369) target = $region73
        $region72: #{dense_tanh.1} parent=68 // pred_region
          _
        $region73: #{dense_tanh.1} parent=68 // pred_fallthru
          _
        %s372 = smul.u32 16, %s22
        %s373 = smul.u32 2, %s24
        %p374 = scmp.lt.s32.totalorder %s372, 31
        %s375 = scalar_select %p374, %s372, 31
        %p376 = scmp.lt.s32.totalorder %s373, 1
        %s377 = scalar_select %p376, %s373, 1
        %s378 = smul.addr %s375, 2
        %s379 = sadd.s32 %s377, %s378
        %s380 = smul.addr %s379, 4
        %s381 = scalar_lea.vmem %s0, %s380
        %p382 = pneg %p59
        %p383 = pneg %p56
        %s384 = sand.u32 %s74, 1
        %s385 = sand.u32 %s74, 1
        %s386 = smul.addr %s385, 128
        %s387 = scalar_lea.vmem [#allocation3], %s386
        %p388 = pneg %p87
        %p389 = pneg %p84
        %p390 = scmp.lt.s32.totalorder %s23, 1
        %s391 = scalar_select %p390, %s23, 1
        %s392 = scalar_lea.vmem %s2, %s391
        %p393 = pneg %p113
        %p394 = pneg %p110
        %p395 = pneg %p141
        %p396 = pneg %p138
        %s397 = sand.u32 %s128, 1
        %s398 = scalar_lea.sflag [#allocation5], %s397
        %s399 = sand.u32 %s128, 1
        %s400 = smul.addr %s399, 128
        %s401 = scalar_lea.vmem [#allocation4], %s400
        %s402 = smul.u32 16, %s22
        %s403 = smul.u32 2, %s24
        %p404 = scmp.lt.s32.totalorder %s402, 31
        %s405 = scalar_select %p404, %s402, 31
        %p406 = scmp.lt.s32.totalorder %s403, 1
        %s407 = scalar_select %p406, %s403, 1
        %s408 = smul.addr %s405, 2
        %s409 = sadd.s32 %s407, %s408
        %s410 = smul.addr %s409, 4
        %s411 = scalar_lea.vmem %s0, %s410
        %s412 = smul.u32 16, %s22
        %s413 = smul.u32 2, %s24
        %s414 = smul.u32 32, %s24
        %p415 = scmp.lt.s32.totalorder %s23, 1
        %s416 = scalar_select %p415, %s23, 1
        %s417 = scalar_lea.vmem %s2, %s416
        %s418 = smul.u32 16, %s22
        %p419 = scmp.eq.s32.totalorder %s24, 0
        // Predicated region
        $region74: #{dense_tanh.1} parent=68 // pred_check
          %p420 = pneg %p419
        $region75: #{dense_tanh.1} parent=68 // pred_check_branch
          %422 = sbr.rel (%p420) target = $region77
        $region76: #{dense_tanh.1} parent=68 // pred_region
          %423 = vst [vmem:[#allocation2] sm:$0xff] 0.0
          %424 = vst [vmem:[#allocation2 + $0x8] sm:$0xff] 0.0
          %425 = vst [vmem:[#allocation2 + $0x10] sm:$0xff] 0.0
          %426 = vst [vmem:[#allocation2 + $0x18] sm:$0xff] 0.0
          %427 = vst [vmem:[#allocation2 + $0x20] sm:$0xff] 0.0
          %428 = vst [vmem:[#allocation2 + $0x28] sm:$0xff] 0.0
          %429 = vst [vmem:[#allocation2 + $0x30] sm:$0xff] 0.0
          %430 = vst [vmem:[#allocation2 + $0x38] sm:$0xff] 0.0
          %431 = vst [vmem:[#allocation2 + $0x40] sm:$0xff] 0.0
          %432 = vst [vmem:[#allocation2 + $0x48] sm:$0xff] 0.0
          %433 = vst [vmem:[#allocation2 + $0x50] sm:$0xff] 0.0
          %434 = vst [vmem:[#allocation2 + $0x58] sm:$0xff] 0.0
          %435 = vst [vmem:[#allocation2 + $0x60] sm:$0xff] 0.0
          %436 = vst [vmem:[#allocation2 + $0x68] sm:$0xff] 0.0
          %437 = vst [vmem:[#allocation2 + $0x70] sm:$0xff] 0.0
          %438 = vst [vmem:[#allocation2 + $0x78] sm:$0xff] 0.0
        $region77: #{dense_tanh.1} parent=68 // pred_fallthru
          _
        %v439 = vld [vmem:[#allocation2] sm:$0xff]
        %v440 = vld [vmem:[#allocation2 + $0x8] sm:$0xff]
        %v441 = vld [vmem:[#allocation2 + $0x10] sm:$0xff]
        %v442 = vld [vmem:[#allocation2 + $0x18] sm:$0xff]
        %v443 = vld [vmem:[#allocation2 + $0x20] sm:$0xff]
        %v444 = vld [vmem:[#allocation2 + $0x28] sm:$0xff]
        %v445 = vld [vmem:[#allocation2 + $0x30] sm:$0xff]
        %v446 = vld [vmem:[#allocation2 + $0x38] sm:$0xff]
        %v447 = vld [vmem:[#allocation2 + $0x40] sm:$0xff]
        %v448 = vld [vmem:[#allocation2 + $0x48] sm:$0xff]
        %v449 = vld [vmem:[#allocation2 + $0x50] sm:$0xff]
        %v450 = vld [vmem:[#allocation2 + $0x58] sm:$0xff]
        %v451 = vld [vmem:[#allocation2 + $0x60] sm:$0xff]
        %v452 = vld [vmem:[#allocation2 + $0x68] sm:$0xff]
        %v453 = vld [vmem:[#allocation2 + $0x70] sm:$0xff]
        %v454 = vld [vmem:[#allocation2 + $0x78] sm:$0xff]
        %v455 = vld [vmem:[%s411] sm:$0xff]
        %v456 = vld [vmem:[%s411 + $0x8] sm:$0xff]
        %v457 = vld [vmem:[%s411 + $0x10] sm:$0xff]
        %v458 = vld [vmem:[%s411 + $0x18] sm:$0xff]
        %v459 = vld [vmem:[%s411 + $0x20] sm:$0xff]
        %v460 = vld [vmem:[%s411 + $0x28] sm:$0xff]
        %v461 = vld [vmem:[%s411 + $0x30] sm:$0xff]
        %v462 = vld [vmem:[%s411 + $0x38] sm:$0xff]
        %v463 = vld [vmem:[%s411 + $0x40] sm:$0xff]
        %v464 = vld [vmem:[%s411 + $0x48] sm:$0xff]
        %v465 = vld [vmem:[%s411 + $0x50] sm:$0xff]
        %v466 = vld [vmem:[%s411 + $0x58] sm:$0xff]
        %v467 = vld [vmem:[%s411 + $0x60] sm:$0xff]
        %v468 = vld [vmem:[%s411 + $0x68] sm:$0xff]
        %v469 = vld [vmem:[%s411 + $0x70] sm:$0xff]
        %v470 = vld [vmem:[%s411 + $0x78] sm:$0xff]
        %v471 = vld [vmem:[%s368] sm:$0xf]
        %v472 = vld [vmem:[%s368 + $0x4] sm:$0xf]
        %v473 = vld [vmem:[%s368 + $0x8] sm:$0xf]
        %v474 = vld [vmem:[%s368 + $0xc] sm:$0xf]
        %v475 = vld [vmem:[%s368 + $0x10] sm:$0xf]
        %v476 = vld [vmem:[%s368 + $0x14] sm:$0xf]
        %v477 = vld [vmem:[%s368 + $0x18] sm:$0xf]
        %v478 = vld [vmem:[%s368 + $0x1c] sm:$0xf]
        %v479 = vld [vmem:[%s368 + $0x20] sm:$0xf]
        %v480 = vld [vmem:[%s368 + $0x24] sm:$0xf]
        %v481 = vld [vmem:[%s368 + $0x28] sm:$0xf]
        %v482 = vld [vmem:[%s368 + $0x2c] sm:$0xf]
        %v483 = vld [vmem:[%s368 + $0x30] sm:$0xf]
        %v484 = vld [vmem:[%s368 + $0x34] sm:$0xf]
        %v485 = vld [vmem:[%s368 + $0x38] sm:$0xf]
        %v486 = vld [vmem:[%s368 + $0x3c] sm:$0xf]
        %v487 = vld [vmem:[%s368 + $0x40] sm:$0xf]
        %v488 = vld [vmem:[%s368 + $0x44] sm:$0xf]
        %v489 = vld [vmem:[%s368 + $0x48] sm:$0xf]
        %v490 = vld [vmem:[%s368 + $0x4c] sm:$0xf]
        %v491 = vld [vmem:[%s368 + $0x50] sm:$0xf]
        %v492 = vld [vmem:[%s368 + $0x54] sm:$0xf]
        %v493 = vld [vmem:[%s368 + $0x58] sm:$0xf]
        %v494 = vld [vmem:[%s368 + $0x5c] sm:$0xf]
        %v495 = vld [vmem:[%s368 + $0x60] sm:$0xf]
        %v496 = vld [vmem:[%s368 + $0x64] sm:$0xf]
        %v497 = vld [vmem:[%s368 + $0x68] sm:$0xf]
        %v498 = vld [vmem:[%s368 + $0x6c] sm:$0xf]
        %v499 = vld [vmem:[%s368 + $0x70] sm:$0xf]
        %v500 = vld [vmem:[%s368 + $0x74] sm:$0xf]
        %v501 = vld [vmem:[%s368 + $0x78] sm:$0xf]
        %v502 = vld [vmem:[%s368 + $0x7c] sm:$0xf]
        %v519 = vunpack.c.l.b16 %v455
        %v520 = vunpack.c.h.b16 %v455
        %v521 = vunpack.c.l.b16 %v456
        %v522 = vunpack.c.h.b16 %v456
        %v523 = vunpack.c.l.b16 %v457
        %v524 = vunpack.c.h.b16 %v457
        %v525 = vunpack.c.l.b16 %v458
        %v526 = vunpack.c.h.b16 %v458
        %v527 = vunpack.c.l.b16 %v459
        %v528 = vunpack.c.h.b16 %v459
        %v529 = vunpack.c.l.b16 %v460
        %v530 = vunpack.c.h.b16 %v460
        %v531 = vunpack.c.l.b16 %v461
        %v532 = vunpack.c.h.b16 %v461
        %v533 = vunpack.c.l.b16 %v462
        %v534 = vunpack.c.h.b16 %v462
        %v535 = vunpack.c.l.b16 %v463
        %v536 = vunpack.c.h.b16 %v463
        %v537 = vunpack.c.l.b16 %v464
        %v538 = vunpack.c.h.b16 %v464
        %v539 = vunpack.c.l.b16 %v465
        %v540 = vunpack.c.h.b16 %v465
        %v541 = vunpack.c.l.b16 %v466
        %v542 = vunpack.c.h.b16 %v466
        %v543 = vunpack.c.l.b16 %v467
        %v544 = vunpack.c.h.b16 %v467
        %v545 = vunpack.c.l.b16 %v468
        %v546 = vunpack.c.h.b16 %v468
        %v547 = vunpack.c.l.b16 %v469
        %v548 = vunpack.c.h.b16 %v469
        %v549 = vunpack.c.l.b16 %v470
        %v550 = vunpack.c.h.b16 %v470
        %v551 = vpack.c.b16 %v521, %v519
        %v552 = vpack.c.b16 %v522, %v520
        %v553 = vpack.c.b16 %v525, %v523
        %v554 = vpack.c.b16 %v526, %v524
        %v555 = vpack.c.b16 %v529, %v527
        %v556 = vpack.c.b16 %v530, %v528
        %v557 = vpack.c.b16 %v533, %v531
        %v558 = vpack.c.b16 %v534, %v532
        %v559 = vpack.c.b16 %v537, %v535
        %v560 = vpack.c.b16 %v538, %v536
        %v561 = vpack.c.b16 %v541, %v539
        %v562 = vpack.c.b16 %v542, %v540
        %v563 = vpack.c.b16 %v545, %v543
        %v564 = vpack.c.b16 %v546, %v544
        %v565 = vpack.c.b16 %v549, %v547
        %v566 = vpack.c.b16 %v550, %v548
        %v615 = vunpack.c.l.b16 %v471
        %v616 = vunpack.c.l.b16 %v472
        %v617 = vunpack.c.l.b16 %v473
        %v618 = vunpack.c.l.b16 %v474
        %v619 = vunpack.c.l.b16 %v475
        %v620 = vunpack.c.l.b16 %v476
        %v621 = vunpack.c.l.b16 %v477
        %v622 = vunpack.c.l.b16 %v478
        %v623 = vunpack.c.l.b16 %v479
        %v624 = vunpack.c.l.b16 %v480
        %v625 = vunpack.c.l.b16 %v481
        %v626 = vunpack.c.l.b16 %v482
        %v627 = vunpack.c.l.b16 %v483
        %v628 = vunpack.c.l.b16 %v484
        %v629 = vunpack.c.l.b16 %v485
        %v630 = vunpack.c.l.b16 %v486
        %v631 = vunpack.c.l.b16 %v487
        %v632 = vunpack.c.l.b16 %v488
        %v633 = vunpack.c.l.b16 %v489
        %v634 = vunpack.c.l.b16 %v490
        %v635 = vunpack.c.l.b16 %v491
        %v636 = vunpack.c.l.b16 %v492
        %v637 = vunpack.c.l.b16 %v493
        %v638 = vunpack.c.l.b16 %v494
        %v639 = vunpack.c.l.b16 %v495
        %v640 = vunpack.c.l.b16 %v496
        %v641 = vunpack.c.l.b16 %v497
        %v642 = vunpack.c.l.b16 %v498
        %v643 = vunpack.c.l.b16 %v499
        %v644 = vunpack.c.l.b16 %v500
        %v645 = vunpack.c.l.b16 %v501
        %v646 = vunpack.c.l.b16 %v502
        %v647 = vpack.c.b16 %v616, %v615
        %v648 = vpack.c.b16 %v618, %v617
        %v649 = vpack.c.b16 %v620, %v619
        %v650 = vpack.c.b16 %v622, %v621
        %v651 = vpack.c.b16 %v624, %v623
        %v652 = vpack.c.b16 %v626, %v625
        %v653 = vpack.c.b16 %v628, %v627
        %v654 = vpack.c.b16 %v630, %v629
        %v655 = vpack.c.b16 %v632, %v631
        %v656 = vpack.c.b16 %v634, %v633
        %v657 = vpack.c.b16 %v636, %v635
        %v658 = vpack.c.b16 %v638, %v637
        %v659 = vpack.c.b16 %v640, %v639
        %v660 = vpack.c.b16 %v642, %v641
        %v661 = vpack.c.b16 %v644, %v643
        %v662 = vpack.c.b16 %v646, %v645
        %679 = vmatpush.bf16.msra.mxu0 %v654
        %680 = vmatpush.bf16.msra.mxu0 %v653
        %681 = vmatpush.bf16.msra.mxu0 %v652
        %682 = vmatpush.bf16.msra.mxu0 %v651
        %683 = vmatpush.bf16.msra.mxu0 %v650
        %684 = vmatpush.bf16.msra.mxu0 %v649
        %685 = vmatpush.bf16.msra.mxu0 %v648
        %686 = vmatpush.bf16.msra.mxu0 %v647
        %687 = vmatmul.bf16.gmra.mxu0 %v551
        %v688 = vpop.f32.mrf.mxu0
        %v689 = vadd.f32 0.0, %v688
        %v690 = vpop.f32.mrf.mxu0
        %v691 = vadd.f32 0.0, %v690
        %692 = vmatmul.bf16.gmra.mxu0 %v553
        %v693 = vpop.f32.mrf.mxu0
        %v694 = vadd.f32 0.0, %v693
        %v695 = vpop.f32.mrf.mxu0
        %v696 = vadd.f32 0.0, %v695
        %697 = vmatmul.bf16.gmra.mxu0 %v555
        %v698 = vpop.f32.mrf.mxu0
        %v699 = vadd.f32 0.0, %v698
        %v700 = vpop.f32.mrf.mxu0
        %v701 = vadd.f32 0.0, %v700
        %702 = vmatmul.bf16.gmra.mxu0 %v557
        %v703 = vpop.f32.mrf.mxu0
        %v704 = vadd.f32 0.0, %v703
        %v705 = vpop.f32.mrf.mxu0
        %v706 = vadd.f32 0.0, %v705
        %707 = vmatmul.bf16.gmra.mxu0 %v559
        %v708 = vpop.f32.mrf.mxu0
        %v709 = vadd.f32 0.0, %v708
        %v710 = vpop.f32.mrf.mxu0
        %v711 = vadd.f32 0.0, %v710
        %712 = vmatmul.bf16.gmra.mxu0 %v561
        %v713 = vpop.f32.mrf.mxu0
        %v714 = vadd.f32 0.0, %v713
        %v715 = vpop.f32.mrf.mxu0
        %v716 = vadd.f32 0.0, %v715
        %717 = vmatmul.bf16.gmra.mxu0 %v563
        %v718 = vpop.f32.mrf.mxu0
        %v719 = vadd.f32 0.0, %v718
        %v720 = vpop.f32.mrf.mxu0
        %v721 = vadd.f32 0.0, %v720
        %722 = vmatmul.bf16.gmra.mxu0 %v565
        %v723 = vpop.f32.mrf.mxu0
        %v724 = vadd.f32 0.0, %v723
        %v725 = vpop.f32.mrf.mxu0
        %v726 = vadd.f32 0.0, %v725
        %727 = vdwg.mxu0
        %728 = vmatpush.bf16.msra.mxu0 %v662
        %729 = vmatpush.bf16.msra.mxu0 %v661
        %730 = vmatpush.bf16.msra.mxu0 %v660
        %731 = vmatpush.bf16.msra.mxu0 %v659
        %732 = vmatpush.bf16.msra.mxu0 %v658
        %733 = vmatpush.bf16.msra.mxu0 %v657
        %734 = vmatpush.bf16.msra.mxu0 %v656
        %735 = vmatpush.bf16.msra.mxu0 %v655
        %736 = vmatmul.bf16.gmra.mxu0 %v552
        %v737 = vpop.f32.mrf.mxu0
        %v738 = vadd.f32 %v689, %v737
        %v739 = vpop.f32.mrf.mxu0
        %v740 = vadd.f32 %v691, %v739
        %741 = vmatmul.bf16.gmra.mxu0 %v554
        %v742 = vpop.f32.mrf.mxu0
        %v743 = vadd.f32 %v694, %v742
        %v744 = vpop.f32.mrf.mxu0
        %v745 = vadd.f32 %v696, %v744
        %746 = vmatmul.bf16.gmra.mxu0 %v556
        %v747 = vpop.f32.mrf.mxu0
        %v748 = vadd.f32 %v699, %v747
        %v749 = vpop.f32.mrf.mxu0
        %v750 = vadd.f32 %v701, %v749
        %751 = vmatmul.bf16.gmra.mxu0 %v558
        %v752 = vpop.f32.mrf.mxu0
        %v753 = vadd.f32 %v704, %v752
        %v754 = vpop.f32.mrf.mxu0
        %v755 = vadd.f32 %v706, %v754
        %756 = vmatmul.bf16.gmra.mxu0 %v560
        %v757 = vpop.f32.mrf.mxu0
        %v758 = vadd.f32 %v709, %v757
        %v759 = vpop.f32.mrf.mxu0
        %v760 = vadd.f32 %v711, %v759
        %761 = vmatmul.bf16.gmra.mxu0 %v562
        %v762 = vpop.f32.mrf.mxu0
        %v763 = vadd.f32 %v714, %v762
        %v764 = vpop.f32.mrf.mxu0
        %v765 = vadd.f32 %v716, %v764
        %766 = vmatmul.bf16.gmra.mxu0 %v564
        %v767 = vpop.f32.mrf.mxu0
        %v768 = vadd.f32 %v719, %v767
        %v769 = vpop.f32.mrf.mxu0
        %v770 = vadd.f32 %v721, %v769
        %771 = vmatmul.bf16.gmra.mxu0 %v566
        %v772 = vpop.f32.mrf.mxu0
        %v773 = vadd.f32 %v724, %v772
        %v774 = vpop.f32.mrf.mxu0
        %v775 = vadd.f32 %v726, %v774
        %776 = vdwg.mxu0
        %v777 = vadd.f32 %v439, %v738
        %v778 = vadd.f32 %v440, %v740
        %v779 = vadd.f32 %v441, %v743
        %v780 = vadd.f32 %v442, %v745
        %v781 = vadd.f32 %v443, %v748
        %v782 = vadd.f32 %v444, %v750
        %v783 = vadd.f32 %v445, %v753
        %v784 = vadd.f32 %v446, %v755
        %v785 = vadd.f32 %v447, %v758
        %v786 = vadd.f32 %v448, %v760
        %v787 = vadd.f32 %v449, %v763
        %v788 = vadd.f32 %v450, %v765
        %v789 = vadd.f32 %v451, %v768
        %v790 = vadd.f32 %v452, %v770
        %v791 = vadd.f32 %v453, %v773
        %v792 = vadd.f32 %v454, %v775
        %793 = vst [vmem:[#allocation2] sm:$0xff] %v777
        %794 = vst [vmem:[#allocation2 + $0x8] sm:$0xff] %v778
        %795 = vst [vmem:[#allocation2 + $0x10] sm:$0xff] %v779
        %796 = vst [vmem:[#allocation2 + $0x18] sm:$0xff] %v780
        %797 = vst [vmem:[#allocation2 + $0x20] sm:$0xff] %v781
        %798 = vst [vmem:[#allocation2 + $0x28] sm:$0xff] %v782
        %799 = vst [vmem:[#allocation2 + $0x30] sm:$0xff] %v783
        %800 = vst [vmem:[#allocation2 + $0x38] sm:$0xff] %v784
        %801 = vst [vmem:[#allocation2 + $0x40] sm:$0xff] %v785
        %802 = vst [vmem:[#allocation2 + $0x48] sm:$0xff] %v786
        %803 = vst [vmem:[#allocation2 + $0x50] sm:$0xff] %v787
        %804 = vst [vmem:[#allocation2 + $0x58] sm:$0xff] %v788
        %805 = vst [vmem:[#allocation2 + $0x60] sm:$0xff] %v789
        %806 = vst [vmem:[#allocation2 + $0x68] sm:$0xff] %v790
        %807 = vst [vmem:[#allocation2 + $0x70] sm:$0xff] %v791
        %808 = vst [vmem:[#allocation2 + $0x78] sm:$0xff] %v792
        // Predicated region
        $region78: #{dense_tanh.1} parent=68 // pred_check
          %p809 = pneg %p419
        $region79: #{dense_tanh.1} parent=68 // pred_check_branch
          %811 = sbr.rel (%p809) target = $region81
        $region80: #{dense_tanh.1} parent=68 // pred_region
          %v812 = vld [vmem:[#allocation2] sm:$0xff]
          %v813 = vld [vmem:[#allocation2 + $0x8] sm:$0xff]
          %v814 = vld [vmem:[#allocation2 + $0x10] sm:$0xff]
          %v815 = vld [vmem:[#allocation2 + $0x18] sm:$0xff]
          %v816 = vld [vmem:[#allocation2 + $0x20] sm:$0xff]
          %v817 = vld [vmem:[#allocation2 + $0x28] sm:$0xff]
          %v818 = vld [vmem:[#allocation2 + $0x30] sm:$0xff]
          %v819 = vld [vmem:[#allocation2 + $0x38] sm:$0xff]
          %v820 = vld [vmem:[#allocation2 + $0x40] sm:$0xff]
          %v821 = vld [vmem:[#allocation2 + $0x48] sm:$0xff]
          %v822 = vld [vmem:[#allocation2 + $0x50] sm:$0xff]
          %v823 = vld [vmem:[#allocation2 + $0x58] sm:$0xff]
          %v824 = vld [vmem:[#allocation2 + $0x60] sm:$0xff]
          %v825 = vld [vmem:[#allocation2 + $0x68] sm:$0xff]
          %v826 = vld [vmem:[#allocation2 + $0x70] sm:$0xff]
          %v827 = vld [vmem:[#allocation2 + $0x78] sm:$0xff]
          %v828 = vld [vmem:[%s417] sm:$0x1]
          %v830 = vperm.slane %v828, 0
          %v832 = vadd.f32 %v812, %v830
          %v833 = vadd.f32 %v813, %v830
          %v834 = vadd.f32 %v814, %v830
          %v835 = vadd.f32 %v815, %v830
          %v836 = vadd.f32 %v816, %v830
          %v837 = vadd.f32 %v817, %v830
          %v838 = vadd.f32 %v818, %v830
          %v839 = vadd.f32 %v819, %v830
          %v840 = vadd.f32 %v820, %v830
          %v841 = vadd.f32 %v821, %v830
          %v842 = vadd.f32 %v822, %v830
          %v843 = vadd.f32 %v823, %v830
          %v844 = vadd.f32 %v824, %v830
          %v845 = vadd.f32 %v825, %v830
          %v846 = vadd.f32 %v826, %v830
          %v847 = vadd.f32 %v827, %v830
          %v848 = vtanh.pop %v832
          %v849 = vtanh.pop %v833
          %v850 = vtanh.pop %v834
          %v851 = vtanh.pop %v835
          %v852 = vtanh.pop %v836
          %v853 = vtanh.pop %v837
          %v854 = vtanh.pop %v838
          %v855 = vtanh.pop %v839
          %v856 = vtanh.pop %v840
          %v857 = vtanh.pop %v841
          %v858 = vtanh.pop %v842
          %v859 = vtanh.pop %v843
          %v860 = vtanh.pop %v844
          %v861 = vtanh.pop %v845
          %v862 = vtanh.pop %v846
          %v863 = vtanh.pop %v847
          %864 = vst [vmem:[%s401] sm:$0xff] %v848
          %865 = vst [vmem:[%s401 + $0x8] sm:$0xff] %v849
          %866 = vst [vmem:[%s401 + $0x10] sm:$0xff] %v850
          %867 = vst [vmem:[%s401 + $0x18] sm:$0xff] %v851
          %868 = vst [vmem:[%s401 + $0x20] sm:$0xff] %v852
          %869 = vst [vmem:[%s401 + $0x28] sm:$0xff] %v853
          %870 = vst [vmem:[%s401 + $0x30] sm:$0xff] %v854
          %871 = vst [vmem:[%s401 + $0x38] sm:$0xff] %v855
          %872 = vst [vmem:[%s401 + $0x40] sm:$0xff] %v856
          %873 = vst [vmem:[%s401 + $0x48] sm:$0xff] %v857
          %874 = vst [vmem:[%s401 + $0x50] sm:$0xff] %v858
          %875 = vst [vmem:[%s401 + $0x58] sm:$0xff] %v859
          %876 = vst [vmem:[%s401 + $0x60] sm:$0xff] %v860
          %877 = vst [vmem:[%s401 + $0x68] sm:$0xff] %v861
          %878 = vst [vmem:[%s401 + $0x70] sm:$0xff] %v862
          %879 = vst [vmem:[%s401 + $0x78] sm:$0xff] %v863
        $region81: #{dense_tanh.1} parent=68 // pred_fallthru
          _
        %s880 = sand.u32 %s128, 1
        %s881 = scalar_lea.sflag [#allocation5], %s880
        %s882 = sand.u32 %s128, 1
        %s883 = smul.addr %s882, 128
        %s884 = scalar_lea.vmem [#allocation4], %s883
        // Predicated region
        $region82: #{dense_tanh.1} parent=68 // pred_check
          %p885 = pneg %p138
        $region83: #{dense_tanh.1} parent=68 // pred_check_branch
          %887 = sbr.rel (%p885) target = $region85
        $region84: #{dense_tanh.1} parent=68 // pred_region
          %s888 = smul.u32 16, %s22
          %890 = vsyncadd %s881, 0
          %s891 = smul.addr %s888, 2
          %s892 = sadd.s32 %s23, %s891
          %s893 = smul.addr %s892, 8
          %s894 = scalar_lea.hbm %s3, %s893
          %s895 = sshll.u32 %s884, 4
          %s896 = int_to_ptr.vmem [resolvable:$true] %s895
          %s897 = sshll.u32 %s894, 4
          %s898 = int_to_ptr.hbm [resolvable:$true] %s897
          %903 = dma.vmem_to_hbm [thread:$0]  %s896, 2048, %s898, %s881, 128, 256, 8
        $region85: #{dense_tanh.1} parent=68 // pred_fallthru
          _
      $region69: #{dense_tanh.1} parent=5 // pred_fallthru
        _
      %p904 = scmp.le.s32.totalorder 2, %s12
      // Predicated region
      $region86: #{dense_tanh.1} parent=5 // pred_check
        %p905 = pneg %p904
      $region87: #{dense_tanh.1} parent=5 // pred_check_branch
        %907 = sbr.rel (%p905) target = $region89
      $region88: #{dense_tanh.1} parent=5 // pred_region
        %s908 = ssub.s32 %s12, 2
        // Predicated region
        $region90: #{dense_tanh.1} parent=88 // pred_check
          %p909 = pneg %p144
        $region91: #{dense_tanh.1} parent=88 // pred_check_branch
          %911 = sbr.rel (%p909) target = $region93
        $region92: #{dense_tanh.1} parent=88 // pred_region
          %s912 = sand.u32 %s129, 1
          %s913 = scalar_lea.sflag [#allocation5], %s912
          %s914 = sand.u32 %s129, 1
          %s915 = smul.addr %s914, 128
          %s916 = scalar_lea.vmem [#allocation4], %s915
          %918 = dma.done %s913, 2048
        $region93: #{dense_tanh.1} parent=88 // pred_fallthru
          _
      $region89: #{dense_tanh.1} parent=5 // pred_fallthru
        _
    $region6: #{dense_tanh.1} parent=1 // loop_footer
      %s16 = sadd.s32 1, %s12
    $region7: #{dense_tanh.1} parent=1 // loop_footer_branch
      %11 = sbr.rel target = $region3
    $region8: #{dense_tanh.1} parent=1 // loop_exit
      _
    %919 = vsyncpa [#allocation5], 1
    %s920 = scalar_lea.sflag [#allocation5], 1
    %921 = vsyncpa %s920, 1

</llo_original>
